<compile_context>
chip_gen: v6e
topology: v6e:2x2x1
jax: 0.10.0
libtpu: 0.0.40
codegen_flags: <defaults>
</compile_context>

<pallas_src>
import jax
import jax.numpy as jnp
from jax.experimental import pallas as pl
from jax.experimental.pallas import tpu as pltpu

TB = 8          # boards per grid step (sublane rows)
SPAD = 32       # lane-padded state width (9 real cells + pad lanes == 1.0)
D_PAD = 128     # lane-dense output width of every layer block
K1 = 32         # layer-1 contraction depth per compare block
K23 = 128       # layer-2/3 contraction depth (full activation width)
R_ONE, R_ZERO, R_HALF = 0, 32, 64        # slab row offsets of the W1 splits
R_L2, R_L3 = 96, 224                     # slab row offsets of layers 2 / 3
P_ROWS = R_L3 + K23                      # 352 total slab rows
BIAS_ROW1 = 9   # row of block "==1" picked by the forced-1.0 pad lane 9
CARRY = 18      # hidden lane carrying an exact 1.0 (feeds b2 / b3 rows)


# ---------------------------------------------------------------------------
# Pallas kernel: in-kernel one-hot + fused 3-layer MLP with folded biases
# ---------------------------------------------------------------------------
def mlp_kernel(s_ref, p_ref, o_ref):
    s = s_ref[...]                                       # (8, 32) f32 states
    # torch processInput: slot 3i <- state==1, 3i+1 <- state==0, 3i+2 <- 0.5.
    # Compares / selects stay f32 (v5e-safe); single convert to bf16 (0/1 exact).
    one = jnp.where(s == 1.0, 1.0, 0.0).astype(jnp.bfloat16)
    zero = jnp.where(s == 0.0, 1.0, 0.0).astype(jnp.bfloat16)
    half = jnp.where(s == 0.5, 1.0, 0.0).astype(jnp.bfloat16)

    # fc1: three (8,32)x(32,128) MXU matmuls, f32 accumulation.  Pad lane 9 of
    # `one` is always 1.0 and picks slab row 9 = [b1 | carry-1 at lane 18].
    h = jnp.dot(one, p_ref[R_ONE:R_ONE + K1, :], preferred_element_type=jnp.float32)
    h = h + jnp.dot(zero, p_ref[R_ZERO:R_ZERO + K1, :], preferred_element_type=jnp.float32)
    h = h + jnp.dot(half, p_ref[R_HALF:R_HALF + K1, :], preferred_element_type=jnp.float32)
    h = jnp.maximum(h, 0.0)                              # relu(fc1), f32 VPU

    # fc2: full (8,128) x (128,128); rows >= 19 of the block are zero.
    h = jnp.dot(h.astype(jnp.bfloat16), p_ref[R_L2:R_L2 + K23, :],
                preferred_element_type=jnp.float32)
    h = jnp.maximum(h, 0.0)                              # relu(fc2)

    # fc3 (no relu); bias row 18 is selected by the carried-1 lane.
    o_ref[...] = jnp.dot(h.astype(jnp.bfloat16), p_ref[R_L3:R_L3 + K23, :],
                         preferred_element_type=jnp.float32)


def mlp_pallas(s_pad, packed):
    bp = s_pad.shape[0]
    return pl.pallas_call(
        mlp_kernel,
        out_shape=jax.ShapeDtypeStruct((bp, D_PAD), jnp.float32),
        grid=(bp // TB,),
        in_specs=[
            pl.BlockSpec((TB, SPAD), lambda i: (i, 0)),          # per-tile states
            pl.BlockSpec((P_ROWS, D_PAD), lambda i: (0, 0)),     # weight slab, VMEM-resident
        ],
        out_specs=pl.BlockSpec((TB, D_PAD), lambda i: (i, 0)),
        compiler_params=pltpu.CompilerParams(
            dimension_semantics=("parallel",)),                  # dual-TC sharding on v7x
    )(s_pad, packed)


# ---------------------------------------------------------------------------
# One-time parameter packing (hoisted out of the forward path)
# ---------------------------------------------------------------------------
def pack_params(params):
    (w1, b1), (w2, b2), (w3, b3) = params      # torch layout: w is (out, in)
    p = jnp.zeros((P_ROWS, D_PAD), jnp.float32)
    # layer-1, split by input slot: 3i ("==1"), 3i+1 ("==0"), 3i+2 ("==0.5")
    p = p.at[R_ONE:R_ONE + 9, 0:18].set(w1[:, 0::3].T)
    p = p.at[R_ONE + BIAS_ROW1, 0:18].set(b1)            # picked by pad lane 9 == 1.0
    p = p.at[R_ONE + BIAS_ROW1, CARRY].set(1.0)          # carry exact 1 into lane 18
    p = p.at[R_ZERO:R_ZERO + 9, 0:18].set(w1[:, 1::3].T)
    p = p.at[R_HALF:R_HALF + 9, 0:18].set(w1[:, 2::3].T)
    # layer-2 block (K=128, rows 19..127 zero)
    p = p.at[R_L2:R_L2 + 18, 0:18].set(w2.T)
    p = p.at[R_L2 + CARRY, 0:18].set(b2)
    p = p.at[R_L2 + CARRY, CARRY].set(1.0)
    # layer-3 block (K=128, rows 19..127 zero); output lanes 0..8
    p = p.at[R_L3:R_L3 + 18, 0:9].set(w3.T)
    p = p.at[R_L3 + CARRY, 0:9].set(b3)
    return p.astype(jnp.bfloat16)              # MXU operands bf16, f32 accum


# ---------------------------------------------------------------------------
# Forward: pad states to an aligned slab + one pallas_call + output slice
# ---------------------------------------------------------------------------
@jax.jit
def network_forward(states, packed):
    states = jnp.asarray(states, jnp.float32)
    if states.ndim == 1:                       # single board -> (1, 9) like torch
        states = states[None, :]
    b = states.shape[0]
    bp = ((b + TB - 1) // TB) * TB
    # Pad lanes/rows with 1.0: lane 9 == 1.0 selects the folded-b1 row; all
    # other pad contributions hit zero weight rows, padded batch rows are
    # sliced off below.
    s_pad = jnp.ones((bp, SPAD), jnp.float32)
    s_pad = s_pad.at[:b, :9].set(states)
    y = mlp_pallas(s_pad, packed)
    return y[:b, :9]


# ---------------------------------------------------------------------------
# Init + pure-JAX reference (mirrors the kernel's bf16 quantization points)
# ---------------------------------------------------------------------------
def init_linear(key, in_f, out_f):
    kw, kb = jax.random.split(key)
    bound = 1.0 / jnp.sqrt(jnp.float32(in_f))
    w = jax.random.uniform(kw, (out_f, in_f), jnp.float32, -bound, bound)
    b = jax.random.uniform(kb, (out_f,), jnp.float32, -bound, bound)
    return w, b


def process_input_ref(states):
    one = states == 1.0
    zero = states == 0.0
    half = states == 0.5
    return jnp.stack([one, zero, half], axis=-1).astype(jnp.float32).reshape(
        states.shape[0], 27)


def reference_forward(states, params):
    (w1, b1), (w2, b2), (w3, b3) = params
    r = lambda a: a.astype(jnp.bfloat16).astype(jnp.float32)
    x = process_input_ref(states)
    h = jnp.maximum(x @ r(w1).T + r(b1), 0.0)
    h = r(h)                                   # kernel re-quantizes activations to bf16
    h = jnp.maximum(h @ r(w2).T + r(b2), 0.0)
    h = r(h)
    return h @ r(w3).T + r(b3)


if __name__ == "__main__":
    key = jax.random.PRNGKey(0)
    k1, k2, k3, kx = jax.random.split(key, 4)
    params = (
        init_linear(k1, 27, 18),
        init_linear(k2, 18, 18),
        init_linear(k3, 18, 9),
    )
    packed = jax.block_until_ready(pack_params(params))   # packed once, reused

    # Batch of 16 tic-tac-toe states; cells take values in {0, 0.5, 1}.
    vals = jnp.array([0.0, 0.5, 1.0], dtype=jnp.float32)
    states = vals[jax.random.randint(kx, (16, 9), 0, 3)]

    y = network_forward(states, packed)                   # (16, 9)
    jax.block_until_ready(y)
    y_ref = reference_forward(states, params)
    assert y.shape == (16, 9)
    assert jnp.allclose(y, y_ref, atol=1e-3, rtol=1e-3), (y, y_ref)

    # Single-board path keeps the torch module's (1, 9) output semantics.
    y1 = network_forward(states[0], packed)
    jax.block_until_ready(y1)
    assert y1.shape == (1, 9)
    assert jnp.allclose(y1, y_ref[:1], atol=1e-3, rtol=1e-3), (y1, y_ref[:1])

    print("KERNEL_OK")
</pallas_src>

<mosaic_0001>
module attributes {stable_mosaic.version = 11 : i64} {
  func.func @mlp_kernel(%arg0: i32, %arg1: memref<8x32xf32, #tpu.memory_space<vmem>>, %arg2: memref<352x128xbf16, #tpu.memory_space<vmem>>, %arg3: memref<8x128xf32, #tpu.memory_space<vmem>>) attributes {dimension_semantics = [#tpu.dimension_semantics<parallel>], iteration_bounds = array<i64: 2>, scalar_prefetch = 0 : i64, scratch_operands = 0 : i64, tpu.core_type = #tpu.core_type<tc>, window_params = [{transform_indices = @transform_0, window_bounds = array<i64: 8, 32>}, {pipeline_mode = #tpu.pipeline_mode<synchronous>, transform_indices = @transform_1, window_bounds = array<i64: 352, 128>}, {transform_indices = @transform_2, window_bounds = array<i64: 8, 128>}]} {
    %c0 = arith.constant 0 : index
    %c0_0 = arith.constant 0 : index
    %0 = vector.load %arg1[%c0, %c0_0] : memref<8x32xf32, #tpu.memory_space<vmem>>, vector<8x32xf32>
    %cst = arith.constant 1.000000e+00 : f32
    %1 = vector.broadcast %cst : f32 to vector<8x32xf32>
    %2 = arith.cmpf oeq, %0, %1 : vector<8x32xf32>
    %cst_1 = arith.constant 1.000000e+00 : f32
    %cst_2 = arith.constant 0.000000e+00 : f32
    %3 = vector.broadcast %cst_1 : f32 to vector<8x32xf32>
    %4 = vector.broadcast %cst_2 : f32 to vector<8x32xf32>
    %5 = arith.select %2, %3, %4 : vector<8x32xi1>, vector<8x32xf32>
    %6 = arith.truncf %5 : vector<8x32xf32> to vector<8x32xbf16>
    %cst_3 = arith.constant 0.000000e+00 : f32
    %7 = vector.broadcast %cst_3 : f32 to vector<8x32xf32>
    %8 = arith.cmpf oeq, %0, %7 : vector<8x32xf32>
    %cst_4 = arith.constant 1.000000e+00 : f32
    %cst_5 = arith.constant 0.000000e+00 : f32
    %9 = vector.broadcast %cst_4 : f32 to vector<8x32xf32>
    %10 = vector.broadcast %cst_5 : f32 to vector<8x32xf32>
    %11 = arith.select %8, %9, %10 : vector<8x32xi1>, vector<8x32xf32>
    %12 = arith.truncf %11 : vector<8x32xf32> to vector<8x32xbf16>
    %cst_6 = arith.constant 5.000000e-01 : f32
    %13 = vector.broadcast %cst_6 : f32 to vector<8x32xf32>
    %14 = arith.cmpf oeq, %0, %13 : vector<8x32xf32>
    %cst_7 = arith.constant 1.000000e+00 : f32
    %cst_8 = arith.constant 0.000000e+00 : f32
    %15 = vector.broadcast %cst_7 : f32 to vector<8x32xf32>
    %16 = vector.broadcast %cst_8 : f32 to vector<8x32xf32>
    %17 = arith.select %14, %15, %16 : vector<8x32xi1>, vector<8x32xf32>
    %18 = arith.truncf %17 : vector<8x32xf32> to vector<8x32xbf16>
    %c0_9 = arith.constant 0 : index
    %c0_10 = arith.constant 0 : index
    %19 = vector.load %arg2[%c0_9, %c0_10] : memref<352x128xbf16, #tpu.memory_space<vmem>>, vector<32x128xbf16>
    %cst_11 = arith.constant dense<0.000000e+00> : vector<8x128xf32>
    %20 = tpu.matmul %6, %19, %cst_11 {dimension_numbers = #tpu.dot_dimension_numbers<[1], [0], [0], [1], [0, 0, 1, 1], [], []>} : vector<8x32xbf16>, vector<32x128xbf16>, vector<8x128xf32> -> vector<8x128xf32>
    %c32 = arith.constant 32 : index
    %c0_12 = arith.constant 0 : index
    %21 = vector.load %arg2[%c32, %c0_12] : memref<352x128xbf16, #tpu.memory_space<vmem>>, vector<32x128xbf16>
    %cst_13 = arith.constant dense<0.000000e+00> : vector<8x128xf32>
    %22 = tpu.matmul %12, %21, %cst_13 {dimension_numbers = #tpu.dot_dimension_numbers<[1], [0], [0], [1], [0, 0, 1, 1], [], []>} : vector<8x32xbf16>, vector<32x128xbf16>, vector<8x128xf32> -> vector<8x128xf32>
    %23 = arith.addf %20, %22 : vector<8x128xf32>
    %c64 = arith.constant 64 : index
    %c0_14 = arith.constant 0 : index
    %24 = vector.load %arg2[%c64, %c0_14] : memref<352x128xbf16, #tpu.memory_space<vmem>>, vector<32x128xbf16>
    %cst_15 = arith.constant dense<0.000000e+00> : vector<8x128xf32>
    %25 = tpu.matmul %18, %24, %cst_15 {dimension_numbers = #tpu.dot_dimension_numbers<[1], [0], [0], [1], [0, 0, 1, 1], [], []>} : vector<8x32xbf16>, vector<32x128xbf16>, vector<8x128xf32> -> vector<8x128xf32>
    %26 = arith.addf %23, %25 : vector<8x128xf32>
    %cst_16 = arith.constant 0.000000e+00 : f32
    %27 = vector.broadcast %cst_16 : f32 to vector<8x128xf32>
    %28 = arith.maximumf %26, %27 : vector<8x128xf32>
    %29 = arith.truncf %28 : vector<8x128xf32> to vector<8x128xbf16>
    %c96 = arith.constant 96 : index
    %c0_17 = arith.constant 0 : index
    %30 = vector.load %arg2[%c96, %c0_17] : memref<352x128xbf16, #tpu.memory_space<vmem>>, vector<128x128xbf16>
    %cst_18 = arith.constant dense<0.000000e+00> : vector<8x128xf32>
    %31 = tpu.matmul %29, %30, %cst_18 {dimension_numbers = #tpu.dot_dimension_numbers<[1], [0], [0], [1], [0, 0, 1, 1], [], []>} : vector<8x128xbf16>, vector<128x128xbf16>, vector<8x128xf32> -> vector<8x128xf32>
    %cst_19 = arith.constant 0.000000e+00 : f32
    %32 = vector.broadcast %cst_19 : f32 to vector<8x128xf32>
    %33 = arith.maximumf %31, %32 : vector<8x128xf32>
    %34 = arith.truncf %33 : vector<8x128xf32> to vector<8x128xbf16>
    %c224 = arith.constant 224 : index
    %c0_20 = arith.constant 0 : index
    %35 = vector.load %arg2[%c224, %c0_20] : memref<352x128xbf16, #tpu.memory_space<vmem>>, vector<128x128xbf16>
    %cst_21 = arith.constant dense<0.000000e+00> : vector<8x128xf32>
    %36 = tpu.matmul %34, %35, %cst_21 {dimension_numbers = #tpu.dot_dimension_numbers<[1], [0], [0], [1], [0, 0, 1, 1], [], []>} : vector<8x128xbf16>, vector<128x128xbf16>, vector<8x128xf32> -> vector<8x128xf32>
    %c0_22 = arith.constant 0 : index
    %c0_23 = arith.constant 0 : index
    %37 = vector.load %arg3[%c0_22, %c0_23] : memref<8x128xf32, #tpu.memory_space<vmem>>, vector<8x128xf32>
    tpu.vector_store %arg3[%c0_22, %c0_23], %36 {strides = array<i32>} : memref<8x128xf32, #tpu.memory_space<vmem>>, vector<8x128xf32>,
    return
  }
  func.func @transform_0(%arg0: i32) -> (i32, i32) {
    %c0_i32 = arith.constant 0 : i32
    %c0_i32_0 = arith.constant 0 : i32
    return %arg0, %c0_i32 : i32, i32
  }
  func.func @transform_1(%arg0: i32) -> (i32, i32) {
    %c0_i32 = arith.constant 0 : i32
    %c0_i32_0 = arith.constant 0 : i32
    %c0_i32_1 = arith.constant 0 : i32
    return %c0_i32, %c0_i32_0 : i32, i32
  }
  func.func @transform_2(%arg0: i32) -> (i32, i32) {
    %c0_i32 = arith.constant 0 : i32
    %c0_i32_0 = arith.constant 0 : i32
    return %arg0, %c0_i32 : i32, i32
  }
}

</mosaic_0001>

<llo_original>
// kernel: network_forward.1
$region0: #{network_forward.1}
  #allocation0 [shape = 'u32[]', space=smem, size = 0x4, offset = 0x4, fixed_abs, tag = 'smem constant byte address 0x4 - core index']
  #allocation1 [shape = 'u32[144,128]{1,0:T(1,128)}', space=vmem, size = 0x12000, scoped, tag = 'internal scratch']
  %s0 = inlined_call_operand.vmem [shape: f32[16,32], index: 0, kind: input, shape index: {}]
  %s1 = inlined_call_operand.hbm [shape: bf16[352,128], index: 1, kind: input, shape index: {}]
  %s2 = inlined_call_operand.hbm [shape: f32[16,128], index: 2, kind: output, shape index: {}]
  %s3 = sld [smem:[#allocation0]]
  $region45: #{network_forward.1} parent=0
    _
  %s5 = ssub.s32 1, %s3
  %s6 = scalar_select 0, %s5, %s3
  $region1: #{network_forward.1} parent=0
    #allocation2 [shape = 'u8[90112]{0}', space=vmem, size = 0x16000, scoped, tag = 'input window, operand 1, single buffered']
    #allocation3 [shape = 's32[2]{0}', space=sflag, size = 0x8, scoped, tag = 'scoped memory for network_forward.1']
    #allocation4 [shape = 's32[2]{0}', space=sflag, size = 0x8, scoped, tag = 'scoped memory for network_forward.1']
    #allocation5 [shape = 'u8[8192]{0}', space=vmem, size = 0x2000, scoped, tag = 'output window, operand 0']
    %7 = vsyncpa [#allocation3], 0
    %8 = vsyncpa [#allocation4], 0
    %s9 = scalar_lea.sflag [#allocation4], 1
    %10 = vsyncpa %s9, 0
    loop: start=0, step=1, limit=4
    $region2: #{network_forward.1} parent=1 // loop_pre_header
      _
    $region3: #{network_forward.1} parent=1 // loop_header
      %s12 = sphi 0, %s16
      %p13 = scmp.ge.s32.totalorder %s12, 4
      %s22 = sphi 0, %s24
      %s25 = sphi 0, %s22
      %s26 = sphi 0, %s25
      %s42 = sphi 0, %s26
      %s46 = sphi 0, %s46
      %s48 = sphi 0, %s46
      %s49 = sphi 0, %s48
      %s63 = sphi 0, %s49
      %s69 = sphi 0, %s71
      %s72 = sphi 0, %s69
      %s73 = sphi 0, %s72
      %s89 = sphi 0, %s73
    $region4: #{network_forward.1} parent=1 // loop_header_branch
      %15 = sbr.rel (%p13) target = $region8
    $region5: #{network_forward.1} parent=1 // loop_body
      %s17 = ssub.s32 %s12, 1
      %s18 = ssub.s32 %s12, 2
      %s19 = sadd.s32 %s12, 1
      %s20 = ssub.s32 %s12, %s19
      %p21 = scmp.eq.s32.totalorder %s20, 0
      %s23 = sadd.s32 %s22, 1
      %s24 = scalar_select %p21, %s22, %s23
      %p27 = pneg %p21
      %p28 = scmp.eq.s32.totalorder %s12, 1
      %p29 = por %p27, %p28
      %p30 = scmp.ne.s32.totalorder %s22, %s25
      %p31 = scmp.eq.s32.totalorder %s12, 0
      %p32 = por %p30, %p31
      %p33 = scmp.ne.s32.totalorder %s22, %s25
      %p34 = scmp.eq.s32.totalorder %s17, 1
      %p35 = por %p33, %p34
      %p36 = scmp.ne.s32.totalorder %s25, %s26
      %p37 = scmp.eq.s32.totalorder %s17, 0
      %p38 = por %p36, %p37
      %p39 = scmp.ne.s32.totalorder %s25, %s26
      %p40 = scmp.eq.s32.totalorder %s18, 1
      %p41 = por %p39, %p40
      %p43 = scmp.ne.s32.totalorder %s26, %s42
      %p44 = scmp.eq.s32.totalorder %s18, 0
      %p45 = por %p43, %p44
      %s47 = sadd.s32 %s46, 1
      %p50 = scmp.eq.s32.totalorder %s12, 1
      %p51 = scmp.ne.s32.totalorder %s46, %s48
      %p52 = scmp.eq.s32.totalorder %s12, 0
      %p53 = por %p51, %p52
      %p54 = scmp.ne.s32.totalorder %s46, %s48
      %p55 = scmp.eq.s32.totalorder %s17, 1
      %p56 = por %p54, %p55
      %p57 = scmp.ne.s32.totalorder %s48, %s49
      %p58 = scmp.eq.s32.totalorder %s17, 0
      %p59 = por %p57, %p58
      %p60 = scmp.ne.s32.totalorder %s48, %s49
      %p61 = scmp.eq.s32.totalorder %s18, 1
      %p62 = por %p60, %p61
      %p64 = scmp.ne.s32.totalorder %s49, %s63
      %p65 = scmp.eq.s32.totalorder %s18, 0
      %p66 = por %p64, %p65
      %s67 = ssub.s32 %s12, %s19
      %p68 = scmp.eq.s32.totalorder %s67, 0
      %s70 = sadd.s32 %s69, 1
      %s71 = scalar_select %p68, %s69, %s70
      %p74 = pneg %p68
      %p75 = scmp.eq.s32.totalorder %s12, 1
      %p76 = por %p74, %p75
      %p77 = scmp.ne.s32.totalorder %s69, %s72
      %p78 = scmp.eq.s32.totalorder %s12, 0
      %p79 = por %p77, %p78
      %p80 = scmp.ne.s32.totalorder %s69, %s72
      %p81 = scmp.eq.s32.totalorder %s17, 1
      %p82 = por %p80, %p81
      %p83 = scmp.ne.s32.totalorder %s72, %s73
      %p84 = scmp.eq.s32.totalorder %s17, 0
      %p85 = por %p83, %p84
      %p86 = scmp.ne.s32.totalorder %s72, %s73
      %p87 = scmp.eq.s32.totalorder %s18, 1
      %p88 = por %p86, %p87
      %p90 = scmp.ne.s32.totalorder %s73, %s89
      %p91 = scmp.eq.s32.totalorder %s18, 0
      %p92 = por %p90, %p91
      %p93 = scmp.le.s32.totalorder 1, %s12
      %p94 = scmp.lt.s32.totalorder %s12, 3
      %p95 = pnand %p93, %p94
      %p96 = pneg %p95
      // Predicated region
      $region9: #{network_forward.1} parent=5 // pred_check
        _
      $region10: #{network_forward.1} parent=5 // pred_check_branch
        %98 = sbr.rel (%p95) target = $region12
      $region11: #{network_forward.1} parent=5 // pred_region
        %s99 = ssub.s32 %s12, 1
        // Predicated region
        $region13: #{network_forward.1} parent=11 // pred_check
          %p100 = pneg %p59
        $region14: #{network_forward.1} parent=11 // pred_check_branch
          %102 = sbr.rel (%p100) target = $region16
        $region15: #{network_forward.1} parent=11 // pred_region
          %s104 = ssub.s32 2816, 2816
          %105 = vsyncadd [#allocation3], %s104
          %s106 = sshll.u32 [#allocation2], 4
          %s107 = int_to_ptr.vmem [resolvable:$true] %s106
          %112 = dma.hbm_to_vmem [thread:$0]  %s1, 2816, %s107, [#allocation3], 64, 64, 4
        $region16: #{network_forward.1} parent=11 // pred_fallthru
          _
      $region12: #{network_forward.1} parent=5 // pred_fallthru
        _
      %p113 = scmp.lt.s32.totalorder %s12, 2
      // Predicated region
      $region17: #{network_forward.1} parent=5 // pred_check
        %p114 = pneg %p113
      $region18: #{network_forward.1} parent=5 // pred_check_branch
        %116 = sbr.rel (%p114) target = $region20
      $region19: #{network_forward.1} parent=5 // pred_region
        // Predicated region
        $region21: #{network_forward.1} parent=19 // pred_check
          %p117 = pneg %p32
        $region22: #{network_forward.1} parent=19 // pred_check_branch
          %119 = sbr.rel (%p117) target = $region24
        $region23: #{network_forward.1} parent=19 // pred_region
          %p120 = scmp.lt.s32.totalorder %s12, 1
          %s121 = scalar_select %p120, %s12, 1
          %s122 = smul.addr %s121, 8
          %s123 = scalar_lea.vmem %s0, %s122
        $region24: #{network_forward.1} parent=19 // pred_fallthru
          _
      $region20: #{network_forward.1} parent=5 // pred_fallthru
        _
      %p124 = scmp.le.s32.totalorder 1, %s12
      %p125 = scmp.lt.s32.totalorder %s12, 3
      %p126 = pnand %p124, %p125
      %p127 = pneg %p126
      // Predicated region
      $region25: #{network_forward.1} parent=5 // pred_check
        _
      $region26: #{network_forward.1} parent=5 // pred_check_branch
        %129 = sbr.rel (%p126) target = $region28
      $region27: #{network_forward.1} parent=5 // pred_region
        %s130 = ssub.s32 %s12, 1
        // Predicated region
        $region29: #{network_forward.1} parent=27 // pred_check
          %p131 = pneg %p59
        $region30: #{network_forward.1} parent=27 // pred_check_branch
          %133 = sbr.rel (%p131) target = $region32
        $region31: #{network_forward.1} parent=27 // pred_region
          %134 = dma.done [#allocation3], 2816
        $region32: #{network_forward.1} parent=27 // pred_fallthru
          _
        %p135 = scmp.lt.s32.totalorder %s17, 1
        %s136 = scalar_select %p135, %s17, 1
        %s137 = smul.addr %s136, 8
        %s138 = scalar_lea.vmem %s0, %s137
        %p139 = pneg %p38
        %p140 = pneg %p35
        %p141 = pneg %p59
        %p142 = pneg %p56
        %p143 = pneg %p85
        %p144 = pneg %p82
        %s145 = sand.u32 %s72, 1
        %s146 = scalar_lea.sflag [#allocation4], %s145
        %s147 = sand.u32 %s72, 1
        %s148 = smul.addr %s147, 8
        %s149 = scalar_lea.vmem [#allocation5], %s148
        %p150 = scmp.lt.s32.totalorder %s17, 1
        %s151 = scalar_select %p150, %s17, 1
        %s152 = smul.addr %s151, 8
        %s153 = scalar_lea.vmem %s0, %s152
        %v155 = vld [vmem:[%s153] sm:$0xff]
        %vm156 = vcmp.eq.f32.partialorder %v155, 1.0
        %v157 = vsel %vm156, 1.0, 0.0
        %v158 = vpack.c.bf16 %v157, %v157
        %vm159 = vcmp.eq.f32.partialorder %v155, 0.0
        %v160 = vsel %vm159, 1.0, 0.0
        %v161 = vpack.c.bf16 %v160, %v160
        %vm162 = vcmp.eq.f32.partialorder %v155, 0.5
        %v163 = vsel %vm162, 1.0, 0.0
        %v164 = vpack.c.bf16 %v163, %v163
        %v165 = vld [vmem:[#allocation2] sm:$0xf]
        %v166 = vld [vmem:[#allocation2 + $0x4] sm:$0xf]
        %v167 = vld [vmem:[#allocation2 + $0x8] sm:$0xf]
        %v168 = vld [vmem:[#allocation2 + $0xc] sm:$0xf]
        %v169 = vld [vmem:[#allocation2 + $0x10] sm:$0xf]
        %v170 = vld [vmem:[#allocation2 + $0x14] sm:$0xf]
        %v171 = vld [vmem:[#allocation2 + $0x18] sm:$0xf]
        %v172 = vld [vmem:[#allocation2 + $0x1c] sm:$0xf]
        %v177 = vunpack.c.l.b16 %v169
        %v178 = vunpack.c.l.b16 %v170
        %v179 = vunpack.c.l.b16 %v171
        %v180 = vunpack.c.l.b16 %v172
        %v181 = vpack.c.b16 %v178, %v177
        %v182 = vpack.c.b16 %v180, %v179
        %vm185 = vcmask 261120
        %v187 = vsel %vm185, %v161, 0
        %189 = vmatprep.subr.bf16.mxu0 0
        %190 = vmatpush1.bf16.msra.mxu0 0
        %191 = vmatprep.subr.bf16.mxu0 0
        %192 = vmatpush1.bf16.msra.mxu0 0
        %193 = vmatprep.subr.bf16.mxu0 0
        %194 = vmatpush1.bf16.msra.mxu0 0
        %195 = vmatprep.subr.bf16.mxu0 0
        %196 = vmatpush1.bf16.msra.mxu0 0
        %197 = vmatprep.subr.bf16.mxu0 0
        %198 = vmatpush1.bf16.msra.mxu0 0
        %199 = vmatprep.subr.bf16.mxu0 0
        %200 = vmatpush1.bf16.msra.mxu0 0
        %201 = vmatprep.subr.bf16.mxu0 0
        %202 = vmatpush1.bf16.msra.mxu0 %v182
        %203 = vmatprep.subr.bf16.mxu0 0
        %204 = vmatpush1.bf16.msra.mxu0 %v181
        %205 = vmatprep.subr.bf16.mxu0 0
        %206 = vmatpush2.bf16.msra.mxu0 0
        %207 = vmatprep.subr.bf16.mxu0 0
        %208 = vmatpush2.bf16.msra.mxu0 0
        %209 = vmatprep.subr.bf16.mxu0 0
        %210 = vmatpush2.bf16.msra.mxu0 0
        %211 = vmatprep.subr.bf16.mxu0 0
        %212 = vmatpush2.bf16.msra.mxu0 0
        %213 = vmatprep.subr.bf16.mxu0 0
        %214 = vmatpush2.bf16.msra.mxu0 0
        %215 = vmatprep.subr.bf16.mxu0 0
        %216 = vmatpush2.bf16.msra.mxu0 0
        %217 = vmatprep.subr.bf16.mxu0 0
        %218 = vmatpush2.bf16.msra.mxu0 0
        %219 = vmatprep.subr.bf16.mxu0 0
        %220 = vmatpush2.bf16.msra.mxu0 0
        %221 = vmatprep.mubr.bf16.mxu0 0
        %222 = vmatmul.mubr.bf16.gmra.mxu0 %v187
        %v223 = vpop.f32.mrf.mxu0
        %v224 = vadd.f32 0.0, %v223
        %v225 = vpop.f32.mrf.mxu0
        %v226 = vpop.f32.mrf.mxu0
        %v227 = vpop.f32.mrf.mxu0
        %228 = vdwg.mxu0
        %v233 = vunpack.c.l.b16 %v165
        %v234 = vunpack.c.l.b16 %v166
        %v235 = vunpack.c.l.b16 %v167
        %v236 = vunpack.c.l.b16 %v168
        %v237 = vpack.c.b16 %v234, %v233
        %v238 = vpack.c.b16 %v236, %v235
        %v242 = vsel %vm185, %v158, 0
        %244 = vmatprep.subr.bf16.mxu0 0
        %245 = vmatpush1.bf16.msra.mxu0 0
        %246 = vmatprep.subr.bf16.mxu0 0
        %247 = vmatpush1.bf16.msra.mxu0 0
        %248 = vmatprep.subr.bf16.mxu0 0
        %249 = vmatpush1.bf16.msra.mxu0 0
        %250 = vmatprep.subr.bf16.mxu0 0
        %251 = vmatpush1.bf16.msra.mxu0 0
        %252 = vmatprep.subr.bf16.mxu0 0
        %253 = vmatpush1.bf16.msra.mxu0 0
        %254 = vmatprep.subr.bf16.mxu0 0
        %255 = vmatpush1.bf16.msra.mxu0 0
        %256 = vmatprep.subr.bf16.mxu0 0
        %257 = vmatpush1.bf16.msra.mxu0 %v238
        %258 = vmatprep.subr.bf16.mxu0 0
        %259 = vmatpush1.bf16.msra.mxu0 %v237
        %260 = vmatprep.subr.bf16.mxu0 0
        %261 = vmatpush2.bf16.msra.mxu0 0
        %262 = vmatprep.subr.bf16.mxu0 0
        %263 = vmatpush2.bf16.msra.mxu0 0
        %264 = vmatprep.subr.bf16.mxu0 0
        %265 = vmatpush2.bf16.msra.mxu0 0
        %266 = vmatprep.subr.bf16.mxu0 0
        %267 = vmatpush2.bf16.msra.mxu0 0
        %268 = vmatprep.subr.bf16.mxu0 0
        %269 = vmatpush2.bf16.msra.mxu0 0
        %270 = vmatprep.subr.bf16.mxu0 0
        %271 = vmatpush2.bf16.msra.mxu0 0
        %272 = vmatprep.subr.bf16.mxu0 0
        %273 = vmatpush2.bf16.msra.mxu0 0
        %274 = vmatprep.subr.bf16.mxu0 0
        %275 = vmatpush2.bf16.msra.mxu0 0
        %276 = vmatprep.mubr.bf16.mxu0 0
        %277 = vmatmul.mubr.bf16.gmra.mxu0 %v242
        %v278 = vpop.f32.mrf.mxu0
        %v279 = vadd.f32 %v224, %v278
        %v280 = vpop.f32.mrf.mxu0
        %v281 = vpop.f32.mrf.mxu0
        %v282 = vpop.f32.mrf.mxu0
        %283 = vdwg.mxu0
        %v284 = vld [vmem:[#allocation2 + $0x20] sm:$0xf]
        %v285 = vld [vmem:[#allocation2 + $0x24] sm:$0xf]
        %v286 = vld [vmem:[#allocation2 + $0x28] sm:$0xf]
        %v287 = vld [vmem:[#allocation2 + $0x2c] sm:$0xf]
        %v292 = vunpack.c.l.b16 %v284
        %v293 = vunpack.c.l.b16 %v285
        %v294 = vunpack.c.l.b16 %v286
        %v295 = vunpack.c.l.b16 %v287
        %v296 = vpack.c.b16 %v293, %v292
        %v297 = vpack.c.b16 %v295, %v294
        %v301 = vsel %vm185, %v164, 0
        %303 = vmatprep.subr.bf16.mxu0 0
        %304 = vmatpush1.bf16.msra.mxu0 0
        %305 = vmatprep.subr.bf16.mxu0 0
        %306 = vmatpush1.bf16.msra.mxu0 0
        %307 = vmatprep.subr.bf16.mxu0 0
        %308 = vmatpush1.bf16.msra.mxu0 0
        %309 = vmatprep.subr.bf16.mxu0 0
        %310 = vmatpush1.bf16.msra.mxu0 0
        %311 = vmatprep.subr.bf16.mxu0 0
        %312 = vmatpush1.bf16.msra.mxu0 0
        %313 = vmatprep.subr.bf16.mxu0 0
        %314 = vmatpush1.bf16.msra.mxu0 0
        %315 = vmatprep.subr.bf16.mxu0 0
        %316 = vmatpush1.bf16.msra.mxu0 %v297
        %317 = vmatprep.subr.bf16.mxu0 0
        %318 = vmatpush1.bf16.msra.mxu0 %v296
        %319 = vmatprep.subr.bf16.mxu0 0
        %320 = vmatpush2.bf16.msra.mxu0 0
        %321 = vmatprep.subr.bf16.mxu0 0
        %322 = vmatpush2.bf16.msra.mxu0 0
        %323 = vmatprep.subr.bf16.mxu0 0
        %324 = vmatpush2.bf16.msra.mxu0 0
        %325 = vmatprep.subr.bf16.mxu0 0
        %326 = vmatpush2.bf16.msra.mxu0 0
        %327 = vmatprep.subr.bf16.mxu0 0
        %328 = vmatpush2.bf16.msra.mxu0 0
        %329 = vmatprep.subr.bf16.mxu0 0
        %330 = vmatpush2.bf16.msra.mxu0 0
        %331 = vmatprep.subr.bf16.mxu0 0
        %332 = vmatpush2.bf16.msra.mxu0 0
        %333 = vmatprep.subr.bf16.mxu0 0
        %334 = vmatpush2.bf16.msra.mxu0 0
        %335 = vmatprep.mubr.bf16.mxu0 0
        %336 = vmatmul.mubr.bf16.gmra.mxu0 %v301
        %v337 = vpop.f32.mrf.mxu0
        %v338 = vadd.f32 0.0, %v337
        %v339 = vpop.f32.mrf.mxu0
        %v340 = vpop.f32.mrf.mxu0
        %v341 = vpop.f32.mrf.mxu0
        %342 = vdwg.mxu0
        %v343 = vadd.f32 %v279, %v338
        %v344 = vmax.f32 %v343, 0.0
        %v345 = vpack.c.bf16 %v344, %v344
        %v346 = vld [vmem:[#allocation2 + $0x30] sm:$0xf]
        %v347 = vld [vmem:[#allocation2 + $0x34] sm:$0xf]
        %v348 = vld [vmem:[#allocation2 + $0x38] sm:$0xf]
        %v349 = vld [vmem:[#allocation2 + $0x3c] sm:$0xf]
        %v350 = vld [vmem:[#allocation2 + $0x40] sm:$0xf]
        %v351 = vld [vmem:[#allocation2 + $0x44] sm:$0xf]
        %v352 = vld [vmem:[#allocation2 + $0x48] sm:$0xf]
        %v353 = vld [vmem:[#allocation2 + $0x4c] sm:$0xf]
        %v354 = vld [vmem:[#allocation2 + $0x50] sm:$0xf]
        %v355 = vld [vmem:[#allocation2 + $0x54] sm:$0xf]
        %v356 = vld [vmem:[#allocation2 + $0x58] sm:$0xf]
        %v357 = vld [vmem:[#allocation2 + $0x5c] sm:$0xf]
        %v358 = vld [vmem:[#allocation2 + $0x60] sm:$0xf]
        %v359 = vld [vmem:[#allocation2 + $0x64] sm:$0xf]
        %v360 = vld [vmem:[#allocation2 + $0x68] sm:$0xf]
        %v361 = vld [vmem:[#allocation2 + $0x6c] sm:$0xf]
        %v378 = vunpack.c.l.b16 %v346
        %v379 = vunpack.c.l.b16 %v347
        %v380 = vunpack.c.l.b16 %v348
        %v381 = vunpack.c.l.b16 %v349
        %v382 = vunpack.c.l.b16 %v350
        %v383 = vunpack.c.l.b16 %v351
        %v384 = vunpack.c.l.b16 %v352
        %v385 = vunpack.c.l.b16 %v353
        %v386 = vunpack.c.l.b16 %v354
        %v387 = vunpack.c.l.b16 %v355
        %v388 = vunpack.c.l.b16 %v356
        %v389 = vunpack.c.l.b16 %v357
        %v390 = vunpack.c.l.b16 %v358
        %v391 = vunpack.c.l.b16 %v359
        %v392 = vunpack.c.l.b16 %v360
        %v393 = vunpack.c.l.b16 %v361
        %v394 = vpack.c.b16 %v379, %v378
        %v395 = vpack.c.b16 %v381, %v380
        %v396 = vpack.c.b16 %v383, %v382
        %v397 = vpack.c.b16 %v385, %v384
        %v398 = vpack.c.b16 %v387, %v386
        %v399 = vpack.c.b16 %v389, %v388
        %v400 = vpack.c.b16 %v391, %v390
        %v401 = vpack.c.b16 %v393, %v392
        %410 = vmatprep.subr.bf16.mxu0 0
        %411 = vmatpush1.bf16.msra.mxu0 %v401
        %412 = vmatprep.subr.bf16.mxu0 0
        %413 = vmatpush1.bf16.msra.mxu0 %v400
        %414 = vmatprep.subr.bf16.mxu0 0
        %415 = vmatpush1.bf16.msra.mxu0 %v399
        %416 = vmatprep.subr.bf16.mxu0 0
        %417 = vmatpush1.bf16.msra.mxu0 %v398
        %418 = vmatprep.subr.bf16.mxu0 0
        %419 = vmatpush1.bf16.msra.mxu0 %v397
        %420 = vmatprep.subr.bf16.mxu0 0
        %421 = vmatpush1.bf16.msra.mxu0 %v396
        %422 = vmatprep.subr.bf16.mxu0 0
        %423 = vmatpush1.bf16.msra.mxu0 %v395
        %424 = vmatprep.subr.bf16.mxu0 0
        %425 = vmatpush1.bf16.msra.mxu0 %v394
        %426 = vmatprep.subr.bf16.mxu0 0
        %427 = vmatpush2.bf16.msra.mxu0 0
        %428 = vmatprep.subr.bf16.mxu0 0
        %429 = vmatpush2.bf16.msra.mxu0 0
        %430 = vmatprep.subr.bf16.mxu0 0
        %431 = vmatpush2.bf16.msra.mxu0 0
        %432 = vmatprep.subr.bf16.mxu0 0
        %433 = vmatpush2.bf16.msra.mxu0 0
        %434 = vmatprep.subr.bf16.mxu0 0
        %435 = vmatpush2.bf16.msra.mxu0 0
        %436 = vmatprep.subr.bf16.mxu0 0
        %437 = vmatpush2.bf16.msra.mxu0 0
        %438 = vmatprep.subr.bf16.mxu0 0
        %439 = vmatpush2.bf16.msra.mxu0 0
        %440 = vmatprep.subr.bf16.mxu0 0
        %441 = vmatpush2.bf16.msra.mxu0 0
        %442 = vmatprep.mubr.bf16.mxu0 0
        %443 = vmatmul.mubr.bf16.gmra.mxu0 %v345
        %v444 = vpop.f32.mrf.mxu0
        %v445 = vadd.f32 0.0, %v444
        %v446 = vpop.f32.mrf.mxu0
        %v447 = vpop.f32.mrf.mxu0
        %v448 = vpop.f32.mrf.mxu0
        %449 = vdwg.mxu0
        %v450 = vmax.f32 %v445, 0.0
        %v451 = vpack.c.bf16 %v450, %v450
        %v452 = vld [vmem:[#allocation2 + $0x70] sm:$0xf]
        %v453 = vld [vmem:[#allocation2 + $0x74] sm:$0xf]
        %v454 = vld [vmem:[#allocation2 + $0x78] sm:$0xf]
        %v455 = vld [vmem:[#allocation2 + $0x7c] sm:$0xf]
        %v456 = vld [vmem:[#allocation2 + $0x80] sm:$0xf]
        %v457 = vld [vmem:[#allocation2 + $0x84] sm:$0xf]
        %v458 = vld [vmem:[#allocation2 + $0x88] sm:$0xf]
        %v459 = vld [vmem:[#allocation2 + $0x8c] sm:$0xf]
        %v460 = vld [vmem:[#allocation2 + $0x90] sm:$0xf]
        %v461 = vld [vmem:[#allocation2 + $0x94] sm:$0xf]
        %v462 = vld [vmem:[#allocation2 + $0x98] sm:$0xf]
        %v463 = vld [vmem:[#allocation2 + $0x9c] sm:$0xf]
        %v464 = vld [vmem:[#allocation2 + $0xa0] sm:$0xf]
        %v465 = vld [vmem:[#allocation2 + $0xa4] sm:$0xf]
        %v466 = vld [vmem:[#allocation2 + $0xa8] sm:$0xf]
        %v467 = vld [vmem:[#allocation2 + $0xac] sm:$0xf]
        %v484 = vunpack.c.l.b16 %v452
        %v485 = vunpack.c.l.b16 %v453
        %v486 = vunpack.c.l.b16 %v454
        %v487 = vunpack.c.l.b16 %v455
        %v488 = vunpack.c.l.b16 %v456
        %v489 = vunpack.c.l.b16 %v457
        %v490 = vunpack.c.l.b16 %v458
        %v491 = vunpack.c.l.b16 %v459
        %v492 = vunpack.c.l.b16 %v460
        %v493 = vunpack.c.l.b16 %v461
        %v494 = vunpack.c.l.b16 %v462
        %v495 = vunpack.c.l.b16 %v463
        %v496 = vunpack.c.l.b16 %v464
        %v497 = vunpack.c.l.b16 %v465
        %v498 = vunpack.c.l.b16 %v466
        %v499 = vunpack.c.l.b16 %v467
        %v500 = vpack.c.b16 %v485, %v484
        %v501 = vpack.c.b16 %v487, %v486
        %v502 = vpack.c.b16 %v489, %v488
        %v503 = vpack.c.b16 %v491, %v490
        %v504 = vpack.c.b16 %v493, %v492
        %v505 = vpack.c.b16 %v495, %v494
        %v506 = vpack.c.b16 %v497, %v496
        %v507 = vpack.c.b16 %v499, %v498
        %516 = vmatprep.subr.bf16.mxu0 0
        %517 = vmatpush1.bf16.msra.mxu0 %v507
        %518 = vmatprep.subr.bf16.mxu0 0
        %519 = vmatpush1.bf16.msra.mxu0 %v506
        %520 = vmatprep.subr.bf16.mxu0 0
        %521 = vmatpush1.bf16.msra.mxu0 %v505
        %522 = vmatprep.subr.bf16.mxu0 0
        %523 = vmatpush1.bf16.msra.mxu0 %v504
        %524 = vmatprep.subr.bf16.mxu0 0
        %525 = vmatpush1.bf16.msra.mxu0 %v503
        %526 = vmatprep.subr.bf16.mxu0 0
        %527 = vmatpush1.bf16.msra.mxu0 %v502
        %528 = vmatprep.subr.bf16.mxu0 0
        %529 = vmatpush1.bf16.msra.mxu0 %v501
        %530 = vmatprep.subr.bf16.mxu0 0
        %531 = vmatpush1.bf16.msra.mxu0 %v500
        %532 = vmatprep.subr.bf16.mxu0 0
        %533 = vmatpush2.bf16.msra.mxu0 0
        %534 = vmatprep.subr.bf16.mxu0 0
        %535 = vmatpush2.bf16.msra.mxu0 0
        %536 = vmatprep.subr.bf16.mxu0 0
        %537 = vmatpush2.bf16.msra.mxu0 0
        %538 = vmatprep.subr.bf16.mxu0 0
        %539 = vmatpush2.bf16.msra.mxu0 0
        %540 = vmatprep.subr.bf16.mxu0 0
        %541 = vmatpush2.bf16.msra.mxu0 0
        %542 = vmatprep.subr.bf16.mxu0 0
        %543 = vmatpush2.bf16.msra.mxu0 0
        %544 = vmatprep.subr.bf16.mxu0 0
        %545 = vmatpush2.bf16.msra.mxu0 0
        %546 = vmatprep.subr.bf16.mxu0 0
        %547 = vmatpush2.bf16.msra.mxu0 0
        %548 = vmatprep.mubr.bf16.mxu0 0
        %549 = vmatmul.mubr.bf16.gmra.mxu0 %v451
        %v550 = vpop.f32.mrf.mxu0
        %v551 = vadd.f32 0.0, %v550
        %v552 = vpop.f32.mrf.mxu0
        %v553 = vpop.f32.mrf.mxu0
        %v554 = vpop.f32.mrf.mxu0
        %555 = vdwg.mxu0
        %556 = vst [vmem:[%s149] sm:$0xff] %v551
        %s557 = sand.u32 %s72, 1
        %s558 = scalar_lea.sflag [#allocation4], %s557
        %s559 = sand.u32 %s72, 1
        %s560 = smul.addr %s559, 8
        %s561 = scalar_lea.vmem [#allocation5], %s560
        // Predicated region
        $region33: #{network_forward.1} parent=27 // pred_check
          %p562 = pneg %p82
        $region34: #{network_forward.1} parent=27 // pred_check_branch
          %564 = sbr.rel (%p562) target = $region36
        $region35: #{network_forward.1} parent=27 // pred_region
          %s566 = ssub.s32 128, 128
          %567 = vsyncadd %s558, %s566
          %s568 = smul.addr %s17, 128
          %s569 = scalar_lea.hbm %s2, %s568
          %s571 = sshll.u32 %s561, 4
          %s572 = int_to_ptr.vmem [resolvable:$true] %s571
          %574 = dma.vmem_to_hbm [thread:$0]  %s572, 128, %s569, %s558
        $region36: #{network_forward.1} parent=27 // pred_fallthru
          _
      $region28: #{network_forward.1} parent=5 // pred_fallthru
        _
      %p575 = scmp.le.s32.totalorder 2, %s12
      // Predicated region
      $region37: #{network_forward.1} parent=5 // pred_check
        %p576 = pneg %p575
      $region38: #{network_forward.1} parent=5 // pred_check_branch
        %578 = sbr.rel (%p576) target = $region40
      $region39: #{network_forward.1} parent=5 // pred_region
        %s579 = ssub.s32 %s12, 2
        // Predicated region
        $region41: #{network_forward.1} parent=39 // pred_check
          %p580 = pneg %p88
        $region42: #{network_forward.1} parent=39 // pred_check_branch
          %582 = sbr.rel (%p580) target = $region44
        $region43: #{network_forward.1} parent=39 // pred_region
          %s583 = sand.u32 %s73, 1
          %s584 = scalar_lea.sflag [#allocation4], %s583
          %s585 = sand.u32 %s73, 1
          %s586 = smul.addr %s585, 8
          %s587 = scalar_lea.vmem [#allocation5], %s586
          %588 = dma.done %s584, 128
        $region44: #{network_forward.1} parent=39 // pred_fallthru
          _
      $region40: #{network_forward.1} parent=5 // pred_fallthru
        _
    $region6: #{network_forward.1} parent=1 // loop_footer
      %s16 = sadd.s32 1, %s12
    $region7: #{network_forward.1} parent=1 // loop_footer_branch
      %11 = sbr.rel target = $region3
    $region8: #{network_forward.1} parent=1 // loop_exit
      _
    %589 = vsyncpa [#allocation3], 1
    %s590 = scalar_lea.sflag [#allocation3], 1
    %591 = vsyncpa %s590, 1
    %592 = vsyncpa [#allocation4], 1
    %s593 = scalar_lea.sflag [#allocation4], 1
    %594 = vsyncpa %s593, 1

</llo_original>
